<compile_context>
chip_gen: v5e
topology: v5e:2x2
jax: 0.10.0
libtpu: 0.0.40
codegen_flags: <defaults>
</compile_context>

<pallas_src>
import functools

import jax
import jax.numpy as jnp
import numpy as np
from jax import lax
from jax.experimental import pallas as pl
from jax.experimental.pallas import tpu as pltpu

BN_EPS = 1e-5


# ---------------------------------------------------------------------------
# Generation-aware planning helpers
# ---------------------------------------------------------------------------
def _vmem_budget_bytes():
    """Scoped-VMEM budget: ~48 MiB on v7x (64 MiB physical), ~96 MiB on v5e/v6e."""
    try:
        cap = int(pltpu.get_tpu_info().vmem_capacity_bytes)
    except Exception:
        cap = 64 * 1024 * 1024          # assume the smallest (v7x) if the query fails
    return max((cap * 3) // 4, 32 * 1024 * 1024)


def _split_tiles(tiles):
    """Split per-image row tiles into (grid-axis count, inner double-buffered tiles)."""
    if tiles == 1:
        return 1, 1
    for t_inner in (2, 3, tiles):       # 2 inner tiles already give DMA/compute overlap
        if tiles % t_inner == 0:
            return tiles // t_inner, t_inner
    return 1, tiles


def _plan_rows(H, W, Cin, Cout, D, n_extra, weight_bytes, budget, forced_tile_h=None):
    """Pick (tile_h, num_outer, inner_tiles) with H == num_outer * inner_tiles * tile_h."""
    if forced_tile_h is None:
        divs = [d for d in range(1, H + 1) if H % d == 0]

        def fits(th):
            xwin = 2 * (th + 2 * D) * (W + 2 * D) * Cin * 2           # 2-slot halo window
            outb = 2 * min(2, H // th) * th * W * Cout * 2            # pipelined out block
            tmp = th * W * (9 * Cin * 2 + (n_extra + 2) * Cout * 4)   # im2col / act temps
            return xwin + outb + tmp + weight_bytes <= budget

        # Prefer row tiles with <=50% halo re-read and >=2 tiles per image (DMA overlap +
        # v7x megacore); otherwise whole-image tiles; otherwise the smallest legal tile.
        cands = (sorted([d for d in divs if H // d >= 2 and d >= 4 * D], reverse=True)
                 + [H]
                 + sorted([d for d in divs if H // d >= 2 and d >= D], reverse=True))
        tile_h = cands[-1]
        for th in cands:
            if fits(th):
                tile_h = th
                break
    else:
        tile_h = forced_tile_h
    assert H % tile_h == 0, (H, tile_h)
    tiles = H // tile_h
    assert tiles == 1 or tile_h >= D, (tile_h, D)
    num_outer, inner = _split_tiles(tiles)
    return tile_h, num_outer, inner


def _pick_hw_tile(HW, cap=512):
    best = 1
    for d in range(1, min(HW, cap) + 1):
        if HW % d == 0:
            best = d
    return best


# ---------------------------------------------------------------------------
# Shared halo'd row-window DMA (unpadded HBM source, zero halos in VMEM)
# ---------------------------------------------------------------------------
def _start_window(x_hbm, xwin_ref, sem_ref, *, b, slot, r0, g, g_last, tile_h, D, W):
    """Start the (up to 3) static-size copies for the halo'd row window of tile g."""
    pltpu.make_async_copy(
        x_hbm.at[b, pl.ds(r0, tile_h)],
        xwin_ref.at[slot, pl.ds(D, tile_h), pl.ds(D, W)],
        sem_ref.at[slot, 0]).start()
    if g_last > 0:
        @pl.when(g > 0)
        def _():
            pltpu.make_async_copy(
                x_hbm.at[b, pl.ds(r0 - D, D)],
                xwin_ref.at[slot, pl.ds(0, D), pl.ds(D, W)],
                sem_ref.at[slot, 1]).start()

        @pl.when(g < g_last)
        def _():
            pltpu.make_async_copy(
                x_hbm.at[b, pl.ds(r0 + tile_h, D)],
                xwin_ref.at[slot, pl.ds(tile_h + D, D), pl.ds(D, W)],
                sem_ref.at[slot, 2]).start()


def _wait_window(x_hbm, xwin_ref, sem_ref, *, b, slot, r0, g, g_last,
                 tile_h, D, W, Wp, Cin):
    """Wait for tile g's copies; zero out-of-image row halos for boundary tiles."""
    zrow = jnp.zeros((D, Wp, Cin), jnp.bfloat16)
    pltpu.make_async_copy(
        x_hbm.at[b, pl.ds(r0, tile_h)],
        xwin_ref.at[slot, pl.ds(D, tile_h), pl.ds(D, W)],
        sem_ref.at[slot, 0]).wait()
    if g_last > 0:
        @pl.when(g > 0)
        def _():
            pltpu.make_async_copy(
                x_hbm.at[b, pl.ds(r0 - D, D)],
                xwin_ref.at[slot, pl.ds(0, D), pl.ds(D, W)],
                sem_ref.at[slot, 1]).wait()

        @pl.when(g == 0)
        def _():
            xwin_ref[slot, 0:D, :, :] = zrow

        @pl.when(g < g_last)
        def _():
            pltpu.make_async_copy(
                x_hbm.at[b, pl.ds(r0 + tile_h, D)],
                xwin_ref.at[slot, pl.ds(tile_h + D, D), pl.ds(D, W)],
                sem_ref.at[slot, 2]).wait()

        @pl.when(g == g_last)
        def _():
            xwin_ref[slot, tile_h + D:tile_h + 2 * D, :, :] = zrow
    else:
        xwin_ref[slot, 0:D, :, :] = zrow
        xwin_ref[slot, tile_h + D:tile_h + 2 * D, :, :] = zrow


# ---------------------------------------------------------------------------
# Kernel 1: ASPP pooling branch
#   chunked GAP (ones-row MXU matmul, f32 accumulator) + 1x1 conv + BN + ReLU
#   + its slice of the projection matmul -> (N, 1, Cout) f32
# ---------------------------------------------------------------------------
def _pool_branch_kernel(x_ref, wpool_ref, s_ref, b_ref, wproj_ref, o_ref, acc_ref,
                        *, hw_tile, inv_hw):
    c = pl.program_id(1)

    @pl.when(c == 0)
    def _():
        acc_ref[...] = jnp.zeros_like(acc_ref)

    ones_row = jnp.ones((1, hw_tile), jnp.bfloat16)
    acc_ref[...] += jnp.dot(ones_row, x_ref[...], preferred_element_type=jnp.float32)

    @pl.when(c == pl.num_programs(1) - 1)
    def _():
        mean = (acc_ref[...] * inv_hw).astype(jnp.bfloat16)                  # (1, Cin)
        y = jnp.dot(mean, wpool_ref[...], preferred_element_type=jnp.float32)
        y = jnp.maximum(y * s_ref[...] + b_ref[...], 0.0).astype(jnp.bfloat16)
        o_ref[...] = jnp.dot(y, wproj_ref[...], preferred_element_type=jnp.float32)


def pool_branch(x_flat, w_pool, s_pool, b_pool, w_proj_pool, *, hw_tile, vmem_limit):
    N, HW, Cin = x_flat.shape
    Cout = w_pool.shape[1]
    num_chunks = HW // hw_tile
    kernel = functools.partial(_pool_branch_kernel, hw_tile=hw_tile,
                               inv_hw=float(1.0 / HW))
    return pl.pallas_call(
        kernel,
        out_shape=jax.ShapeDtypeStruct((N, 1, Cout), jnp.float32),
        grid_spec=pltpu.PrefetchScalarGridSpec(
            num_scalar_prefetch=0,
            grid=(N, num_chunks),
            in_specs=[
                pl.BlockSpec((None, hw_tile, Cin), lambda b, c: (b, c, 0)),
                pl.BlockSpec((Cin, Cout), lambda b, c: (0, 0)),
                pl.BlockSpec((1, Cout), lambda b, c: (0, 0)),
                pl.BlockSpec((1, Cout), lambda b, c: (0, 0)),
                pl.BlockSpec((Cout, Cout), lambda b, c: (0, 0)),
            ],
            out_specs=pl.BlockSpec((None, 1, Cout), lambda b, c: (b, 0, 0)),
            scratch_shapes=[pltpu.VMEM((1, Cin), jnp.float32)],
        ),
        compiler_params=pltpu.CompilerParams(
            dimension_semantics=("parallel", "arbitrary"),
            vmem_limit_bytes=vmem_limit),
    )(x_flat, w_pool, s_pool, b_pool, w_proj_pool)


# ---------------------------------------------------------------------------
# Kernel 2: fused ASPP conv branches (im2col) + concat + 1x1 projection + BN + ReLU
#   Unpadded x stays in HBM; halo'd row windows are double-buffer DMA'd in-kernel.
# ---------------------------------------------------------------------------
def _aspp_project_kernel(x_hbm, pool_ref, w1_ref, w3_ref, sbr_ref, bbr_ref,
                         wpc_ref, sp_ref, bp_ref, o_ref,
                         xwin_ref, slab_ref, act_ref, sem_ref,
                         *, rates, tile_h, inner_tiles, num_outer, D, W, Cin, Cout):
    b = pl.program_id(0)
    o = pl.program_id(1)
    T = inner_tiles
    total_tiles = num_outer * T
    g_last = total_tiles - 1
    nrows = tile_h + 2 * D
    Wp = W + 2 * D
    M = tile_h * W
    bf = jnp.bfloat16

    def row0(t):
        return pl.multiple_of((o * T + t) * tile_h, tile_h)

    def start(t, slot):
        _start_window(x_hbm, xwin_ref, sem_ref, b=b, slot=slot, r0=row0(t),
                      g=o * T + t, g_last=g_last, tile_h=tile_h, D=D, W=W)

    def wait(t, slot):
        _wait_window(x_hbm, xwin_ref, sem_ref, b=b, slot=slot, r0=row0(t),
                     g=o * T + t, g_last=g_last, tile_h=tile_h, D=D, W=W,
                     Wp=Wp, Cin=Cin)

    # Prologue DMA for inner tile 0, then zero the column-halo strips (they are never
    # written by the row-window DMAs) while that DMA is in flight.
    start(0, 0)
    zcol = jnp.zeros((2, nrows, D, Cin), bf)
    xwin_ref[:, :, 0:D, :] = zcol
    xwin_ref[:, :, D + W:Wp, :] = zcol

    sbr = sbr_ref[...]                 # (n_br, Cout) folded-BN scales
    bbr = bbr_ref[...]                 # (n_br, Cout) folded-BN biases
    pool_c = pool_ref[...]             # (1, Cout) pooled-branch projection contribution
    sp = sp_ref[...]
    bp = bp_ref[...]

    def compute(t, slot):
        def tap(rs, cs):
            return xwin_ref[slot, rs:rs + tile_h, cs:cs + W, :].reshape(M, Cin)

        # Branch 0: 1x1 conv (center tap).
        pre = jnp.dot(tap(D, D), w1_ref[...], preferred_element_type=jnp.float32)
        act_ref[:, 0:Cout] = jnp.maximum(pre * sbr[0:1, :] + bbr[0:1, :], 0.0).astype(bf)

        # Dilated 3x3 branches: im2col slab in VMEM -> single K=9*Cin MXU matmul each.
        for bi, r in enumerate(rates):
            for k in range(9):
                ky, kx = divmod(k, 3)
                slab_ref[:, k * Cin:(k + 1) * Cin] = tap(D - r + ky * r, D - r + kx * r)
            pre = jnp.dot(slab_ref[...], w3_ref[bi], preferred_element_type=jnp.float32)
            act_ref[:, (bi + 1) * Cout:(bi + 2) * Cout] = jnp.maximum(
                pre * sbr[bi + 1:bi + 2, :] + bbr[bi + 1:bi + 2, :], 0.0).astype(bf)

        # Fused concat + projection (single wide-K matmul) + pooled term + proj BN + ReLU.
        proj = jnp.dot(act_ref[...], wpc_ref[...], preferred_element_type=jnp.float32)
        proj = jnp.maximum((proj + pool_c) * sp + bp, 0.0)
        o_ref[t * M:(t + 1) * M, :] = proj.astype(o_ref.dtype)

    for t in range(T):
        slot = t % 2
        if t + 1 < T:                   # prefetch the next window while computing this one
            start(t + 1, 1 - slot)
        wait(t, slot)
        compute(t, slot)


def aspp_project(x, pool_contrib, w_b0, w_atrous, s_br, b_br, w_proj_conv,
                 s_proj, b_proj, *, rates, tile_h, num_outer, inner_tiles, vmem_limit):
    N, H, W, Cin = x.shape
    Cout = w_b0.shape[1]
    D = max(rates)
    n_br = 1 + len(rates)
    T = inner_tiles
    M = tile_h * W
    nrows = tile_h + 2 * D
    Wp = W + 2 * D
    assert H == num_outer * T * tile_h

    kernel = functools.partial(
        _aspp_project_kernel, rates=tuple(rates), tile_h=tile_h, inner_tiles=T,
        num_outer=num_outer, D=D, W=W, Cin=Cin, Cout=Cout)

    total_tiles = num_outer * T
    flops = (2 * N * H * W * Cin * Cout * (1 + 9 * len(rates))
             + 2 * N * H * W * n_br * Cout * Cout)
    bytes_accessed = (N * total_tiles * nrows * W * Cin * 2
                      + (Cin * Cout * (1 + 9 * len(rates)) + n_br * Cout * Cout) * 2
                      + N * H * W * Cout * 2)

    return pl.pallas_call(
        kernel,
        out_shape=jax.ShapeDtypeStruct((N, H * W, Cout), jnp.bfloat16),
        grid_spec=pltpu.PrefetchScalarGridSpec(
            num_scalar_prefetch=0,
            grid=(N, num_outer),
            in_specs=[
                pl.BlockSpec(memory_space=pl.ANY),                       # x NHWC (HBM)
                pl.BlockSpec((None, 1, Cout), lambda b, o: (b, 0, 0)),   # pooled contrib
                pl.BlockSpec((Cin, Cout), lambda b, o: (0, 0)),          # 1x1 weights
                pl.BlockSpec((len(rates), 9 * Cin, Cout),
                             lambda b, o: (0, 0, 0)),                    # im2col 3x3 weights
                pl.BlockSpec((n_br, Cout), lambda b, o: (0, 0)),         # branch BN scales
                pl.BlockSpec((n_br, Cout), lambda b, o: (0, 0)),         # branch BN biases
                pl.BlockSpec((n_br * Cout, Cout), lambda b, o: (0, 0)),  # projection weights
                pl.BlockSpec((1, Cout), lambda b, o: (0, 0)),            # proj BN scale
                pl.BlockSpec((1, Cout), lambda b, o: (0, 0)),            # proj BN bias
            ],
            out_specs=pl.BlockSpec((None, T * M, Cout), lambda b, o: (b, o, 0)),
            scratch_shapes=[pltpu.VMEM((2, nrows, Wp, Cin), jnp.bfloat16),
                            pltpu.VMEM((M, 9 * Cin), jnp.bfloat16),
                            pltpu.VMEM((M, n_br * Cout), jnp.bfloat16),
                            pltpu.SemaphoreType.DMA((2, 3))],
        ),
        compiler_params=pltpu.CompilerParams(
            dimension_semantics=("parallel", "parallel"),
            vmem_limit_bytes=vmem_limit),
        cost_estimate=pl.CostEstimate(flops=int(flops), transcendentals=0,
                                      bytes_accessed=int(bytes_accessed)),
    )(x, pool_contrib, w_b0, w_atrous, s_br, b_br, w_proj_conv, s_proj, b_proj)


# ---------------------------------------------------------------------------
# Kernel 3: decoder tail 3x3 conv (padding=1) + folded BN + ReLU, bf16 output
# ---------------------------------------------------------------------------
def _final_conv_kernel(x_hbm, w_ref, s_ref, b_ref, o_ref, xwin_ref, slab_ref, sem_ref,
                       *, tile_h, inner_tiles, num_outer, W, C):
    b = pl.program_id(0)
    o = pl.program_id(1)
    T = inner_tiles
    total_tiles = num_outer * T
    g_last = total_tiles - 1
    D = 1
    nrows = tile_h + 2
    Wp = W + 2
    M = tile_h * W
    bf = jnp.bfloat16

    def row0(t):
        return pl.multiple_of((o * T + t) * tile_h, tile_h)

    def start(t, slot):
        _start_window(x_hbm, xwin_ref, sem_ref, b=b, slot=slot, r0=row0(t),
                      g=o * T + t, g_last=g_last, tile_h=tile_h, D=D, W=W)

    def wait(t, slot):
        _wait_window(x_hbm, xwin_ref, sem_ref, b=b, slot=slot, r0=row0(t),
                     g=o * T + t, g_last=g_last, tile_h=tile_h, D=D, W=W,
                     Wp=Wp, Cin=C)

    start(0, 0)
    zcol = jnp.zeros((2, nrows, 1, C), bf)
    xwin_ref[:, :, 0:1, :] = zcol
    xwin_ref[:, :, W + 1:W + 2, :] = zcol

    s = s_ref[...]
    bias = b_ref[...]

    def compute(t, slot):
        for k in range(9):
            ky, kx = divmod(k, 3)
            slab_ref[:, k * C:(k + 1) * C] = (
                xwin_ref[slot, ky:ky + tile_h, kx:kx + W, :].reshape(M, C))
        pre = jnp.dot(slab_ref[...], w_ref[...], preferred_element_type=jnp.float32)
        o_ref[t * M:(t + 1) * M, :] = jnp.maximum(pre * s + bias, 0.0).astype(o_ref.dtype)

    for t in range(T):
        slot = t % 2
        if t + 1 < T:
            start(t + 1, 1 - slot)
        wait(t, slot)
        compute(t, slot)


def final_conv3x3(x, w, s, bias, *, tile_h, num_outer, inner_tiles, vmem_limit):
    N, H, W, C = x.shape
    T = inner_tiles
    M = tile_h * W
    assert H == num_outer * T * tile_h
    kernel = functools.partial(_final_conv_kernel, tile_h=tile_h, inner_tiles=T,
                               num_outer=num_outer, W=W, C=C)
    total_tiles = num_outer * T
    flops = 2 * N * H * W * 9 * C * C
    bytes_accessed = (N * total_tiles * (tile_h + 2) * W * C * 2
                      + 9 * C * C * 2 + N * H * W * C * 2)
    return pl.pallas_call(
        kernel,
        out_shape=jax.ShapeDtypeStruct((N, H * W, C), jnp.bfloat16),
        grid_spec=pltpu.PrefetchScalarGridSpec(
            num_scalar_prefetch=0,
            grid=(N, num_outer),
            in_specs=[
                pl.BlockSpec(memory_space=pl.ANY),                     # proj NHWC (HBM)
                pl.BlockSpec((9 * C, C), lambda b, o: (0, 0)),         # im2col weights
                pl.BlockSpec((1, C), lambda b, o: (0, 0)),
                pl.BlockSpec((1, C), lambda b, o: (0, 0)),
            ],
            out_specs=pl.BlockSpec((None, T * M, C), lambda b, o: (b, o, 0)),
            scratch_shapes=[pltpu.VMEM((2, tile_h + 2, W + 2, C), jnp.bfloat16),
                            pltpu.VMEM((M, 9 * C), jnp.bfloat16),
                            pltpu.SemaphoreType.DMA((2, 3))],
        ),
        compiler_params=pltpu.CompilerParams(
            dimension_semantics=("parallel", "parallel"),
            vmem_limit_bytes=vmem_limit),
        cost_estimate=pl.CostEstimate(flops=int(flops), transcendentals=0,
                                      bytes_accessed=int(bytes_accessed)),
    )(x, w, s, bias)


# ---------------------------------------------------------------------------
# Parameters (deterministic synthetic init; BN folded to scale/bias)
# ---------------------------------------------------------------------------
def init_params(key, in_ch, out_ch, rates):
    n_br = 1 + len(rates)
    keys = jax.random.split(key, 8)

    def bn_fold(k, n):
        k1, k2, k3, k4 = jax.random.split(k, 4)
        gamma = 1.0 + 0.1 * jax.random.normal(k1, (n, out_ch), jnp.float32)
        beta = 0.1 * jax.random.normal(k2, (n, out_ch), jnp.float32)
        mean = 0.05 * jax.random.normal(k3, (n, out_ch), jnp.float32)
        var = 1.0 + 0.1 * jnp.abs(jax.random.normal(k4, (n, out_ch), jnp.float32))
        scale = gamma * lax.rsqrt(var + BN_EPS)
        bias = beta - mean * scale
        return scale, bias

    p = {}
    p['w_b0'] = 0.1 * jax.random.normal(keys[0], (in_ch, out_ch), jnp.float32)
    p['w_atrous'] = 0.1 * jax.random.normal(
        keys[1], (len(rates), 3, 3, in_ch, out_ch), jnp.float32)      # HWIO per branch
    p['w_pool'] = 0.1 * jax.random.normal(keys[2], (in_ch, out_ch), jnp.float32)
    p['w_proj'] = 0.1 * jax.random.normal(
        keys[3], ((n_br + 1) * out_ch, out_ch), jnp.float32)          # concat: b0..b3, pool
    p['w_final'] = 0.1 * jax.random.normal(keys[4], (3, 3, out_ch, out_ch), jnp.float32)
    p['bn_br_s'], p['bn_br_b'] = bn_fold(keys[5], n_br)
    s, b = bn_fold(keys[6], 3)
    p['bn_pool_s'], p['bn_pool_b'] = s[0], b[0]
    p['bn_proj_s'], p['bn_proj_b'] = s[1], b[1]
    p['bn_fin_s'], p['bn_fin_b'] = s[2], b[2]
    return p


# ---------------------------------------------------------------------------
# Forward (mirrors DeepLabV3Decoder.forward: uses features[-1])
# ---------------------------------------------------------------------------
def deeplabv3_decoder_forward(params, rates, *features, tile_h=None, tail_tile_h=None):
    x_nchw = features[-1]
    rates = tuple(rates)
    bf = jnp.bfloat16

    x = jnp.transpose(x_nchw, (0, 2, 3, 1)).astype(bf)       # NCHW -> NHWC, bf16 operand
    N, H, W, Cin = x.shape
    Cout = params['w_b0'].shape[1]
    n_br = 1 + len(rates)
    D = max(rates)
    budget = _vmem_budget_bytes()

    # bf16 MXU operands (accumulation stays f32 inside the kernels).
    w_b0 = params['w_b0'].astype(bf)
    w_atrous = params['w_atrous'].astype(bf).reshape(len(rates), 9 * Cin, Cout)
    w_pool = params['w_pool'].astype(bf)
    w_proj = params['w_proj'].astype(bf)
    w_proj_conv = w_proj[:n_br * Cout]                        # (n_br*Cout, Cout)
    w_proj_pool = w_proj[n_br * Cout:]                        # (Cout, Cout)
    w_final = params['w_final'].astype(bf).reshape(9 * Cout, Cout)

    # (1) ASPP pooling branch (chunked GAP + 1x1 + BN + ReLU + projection slice).
    hw_tile = _pick_hw_tile(H * W)
    pool_contrib = pool_branch(
        x.reshape(N, H * W, Cin), w_pool,
        params['bn_pool_s'].reshape(1, Cout), params['bn_pool_b'].reshape(1, Cout),
        w_proj_pool, hw_tile=hw_tile, vmem_limit=budget)       # (N, 1, Cout) f32

    # (2) Fused ASPP conv branches + concat + projection; single streaming pass over x.
    w2_bytes = 2 * 2 * (Cin * Cout * (1 + 9 * len(rates)) + n_br * Cout * Cout)
    th2, no2, T2 = _plan_rows(H, W, Cin, Cout, D, n_br, w2_bytes, budget,
                              forced_tile_h=tile_h)
    proj_flat = aspp_project(
        x, pool_contrib, w_b0, w_atrous, params['bn_br_s'], params['bn_br_b'],
        w_proj_conv, params['bn_proj_s'].reshape(1, Cout),
        params['bn_proj_b'].reshape(1, Cout),
        rates=rates, tile_h=th2, num_outer=no2, inner_tiles=T2,
        vmem_limit=budget)                                     # (N, H*W, Cout) bf16
    # TODO(synk): nn.Dropout(0.5) after the projection is identity in eval mode.

    # (3) Decoder tail: 3x3 conv (padding=1) + BN + ReLU, bf16 output.
    w3_bytes = 2 * 2 * (9 * Cout * Cout)
    th3, no3, T3 = _plan_rows(H, W, Cout, Cout, 1, 0, w3_bytes, budget,
                              forced_tile_h=tail_tile_h)
    out_flat = final_conv3x3(
        proj_flat.reshape(N, H, W, Cout), w_final,
        params['bn_fin_s'].reshape(1, Cout), params['bn_fin_b'].reshape(1, Cout),
        tile_h=th3, num_outer=no3, inner_tiles=T3, vmem_limit=budget)

    out = out_flat.reshape(N, H, W, Cout)
    # NHWC -> NCHW; single f32 cast after the (bf16-cheap) transpose.
    return jnp.transpose(out, (0, 3, 1, 2)).astype(jnp.float32)


# ---------------------------------------------------------------------------
# Pure-JAX reference (mirrors kernel precision: bf16 operands, f32 accumulation)
# ---------------------------------------------------------------------------
def ref_forward(params, rates, x_nchw):
    f32, bf = jnp.float32, jnp.bfloat16

    def q(a):                       # round to bf16 (MXU operand precision), keep f32
        return a.astype(bf).astype(f32)

    def bnrelu(y, s, b):
        return jnp.maximum(y * s + b, 0.0)

    dn = ('NHWC', 'HWIO', 'NHWC')
    hp = lax.Precision.HIGHEST

    def conv3(xx, w, d):
        return lax.conv_general_dilated(xx, q(w), (1, 1), ((d, d), (d, d)),
                                        rhs_dilation=(d, d), dimension_numbers=dn,
                                        precision=hp)

    x = q(jnp.transpose(x_nchw, (0, 2, 3, 1)).astype(f32))
    N, H, W, _ = x.shape

    branches = [bnrelu(jnp.einsum('nhwc,cd->nhwd', x, q(params['w_b0']), precision=hp),
                       params['bn_br_s'][0], params['bn_br_b'][0])]
    for i, r in enumerate(rates):
        branches.append(bnrelu(conv3(x, params['w_atrous'][i], r),
                               params['bn_br_s'][i + 1], params['bn_br_b'][i + 1]))
    pooled = q(jnp.mean(x, axis=(1, 2)))
    ypool = bnrelu(jnp.einsum('nc,cd->nd', pooled, q(params['w_pool']), precision=hp),
                   params['bn_pool_s'], params['bn_pool_b'])
    branches.append(jnp.broadcast_to(ypool[:, None, None, :], (N, H, W, ypool.shape[-1])))

    cat = jnp.concatenate([q(br) for br in branches], axis=-1)
    proj = bnrelu(jnp.einsum('nhwc,cd->nhwd', cat, q(params['w_proj']), precision=hp),
                  params['bn_proj_s'], params['bn_proj_b'])
    proj = q(proj)
    out = bnrelu(conv3(proj, params['w_final'], 1),
                 params['bn_fin_s'], params['bn_fin_b'])
    return jnp.transpose(out, (0, 3, 1, 2))


if __name__ == "__main__":
    key = jax.random.PRNGKey(0)
    kx, kp = jax.random.split(key)

    # DeepLabV3Decoder(in_channels=8, out_channels=16, atrous_rates=(2, 4, 6));
    # the decoder consumes the last backbone feature map (NCHW).
    in_ch, out_ch = 8, 16
    rates = (2, 4, 6)
    N, H, W = 2, 32, 32

    x = jax.random.normal(kx, (N, in_ch, H, W), jnp.float32)
    params = init_params(kp, in_ch, out_ch, rates)

    # tile_h=8 with H=32 -> 4 row tiles per image, split as grid (N, 2) x 2 inner
    # double-buffered tiles: exercises both parallel grid axes, the DMA prefetch path,
    # and every boundary-halo case even at toy shapes.  (Production shapes use the
    # VMEM-budgeted auto planner instead of forcing tile_h.)
    out = deeplabv3_decoder_forward(params, rates, x, tile_h=8, tail_tile_h=8)
    out = jax.block_until_ready(out)
    assert out.shape == (N, out_ch, H, W), out.shape

    ref = ref_forward(params, rates, x)
    np.testing.assert_allclose(np.asarray(out, np.float32), np.asarray(ref),
                               rtol=2e-2, atol=2e-2)

    print("KERNEL_OK")
</pallas_src>

<mosaic_0001>
module attributes {stable_mosaic.version = 11 : i64} {
  func.func @_pool_branch_kernel(%arg0: i32, %arg1: i32, %arg2: memref<1x512x8xbf16, #tpu.memory_space<vmem>>, %arg3: memref<8x16xbf16, #tpu.memory_space<vmem>>, %arg4: memref<1x16xf32, #tpu.memory_space<vmem>>, %arg5: memref<1x16xf32, #tpu.memory_space<vmem>>, %arg6: memref<16x16xbf16, #tpu.memory_space<vmem>>, %arg7: memref<1x1x16xf32, #tpu.memory_space<vmem>>, %arg8: memref<1x8xf32, #tpu.memory_space<vmem>>) attributes {dimension_semantics = [#tpu.dimension_semantics<parallel>, #tpu.dimension_semantics<arbitrary>], iteration_bounds = array<i64: 2, 2>, scalar_prefetch = 0 : i64, scratch_operands = 1 : i64, tpu.core_type = #tpu.core_type<tc>, window_params = [{transform_indices = @transform_0, window_bounds = array<i64: 1, 512, 8>}, {pipeline_mode = #tpu.pipeline_mode<synchronous>, transform_indices = @transform_1, window_bounds = array<i64: 8, 16>}, {pipeline_mode = #tpu.pipeline_mode<synchronous>, transform_indices = @transform_2, window_bounds = array<i64: 1, 16>}, {pipeline_mode = #tpu.pipeline_mode<synchronous>, transform_indices = @transform_3, window_bounds = array<i64: 1, 16>}, {pipeline_mode = #tpu.pipeline_mode<synchronous>, transform_indices = @transform_4, window_bounds = array<i64: 16, 16>}, {transform_indices = @transform_5, window_bounds = array<i64: 1, 1, 16>}]} {
    %c0_i32 = arith.constant 0 : i32
    %0 = arith.cmpi eq, %arg1, %c0_i32 : i32
    %1 = arith.extui %0 : i1 to i32
    %c0_i32_0 = arith.constant 0 : i32
    %2 = arith.cmpi ne, %1, %c0_i32_0 : i32
    scf.if %2 {
      %cst_9 = arith.constant 0.000000e+00 : f32
      %13 = vector.broadcast %cst_9 : f32 to vector<1x8xf32>
      %c0_10 = arith.constant 0 : index
      %c0_11 = arith.constant 0 : index
      %14 = vector.load %arg8[%c0_10, %c0_11] : memref<1x8xf32, #tpu.memory_space<vmem>>, vector<1x8xf32>
      tpu.vector_store %arg8[%c0_10, %c0_11], %13 {strides = array<i32>} : memref<1x8xf32, #tpu.memory_space<vmem>>, vector<1x8xf32>,
    } else {
    }
    %cst = arith.constant 1.000000e+00 : bf16
    %3 = vector.broadcast %cst : bf16 to vector<1x512xbf16>
    %c0 = arith.constant 0 : index
    %c0_1 = arith.constant 0 : index
    %4 = vector.load %arg8[%c0, %c0_1] : memref<1x8xf32, #tpu.memory_space<vmem>>, vector<1x8xf32>
    %c0_2 = arith.constant 0 : index
    %c0_3 = arith.constant 0 : index
    %c0_4 = arith.constant 0 : index
    %5 = vector.load %arg2[%c0_2, %c0_3, %c0_4] : memref<1x512x8xbf16, #tpu.memory_space<vmem>>, vector<1x512x8xbf16>
    %6 = vector.shape_cast %5 : vector<1x512x8xbf16> to vector<512x8xbf16>
    %cst_5 = arith.constant dense<0.000000e+00> : vector<1x8xf32>
    %7 = tpu.matmul %3, %6, %cst_5 {dimension_numbers = #tpu.dot_dimension_numbers<[1], [0], [0], [1], [0, 0, 1, 1], [], []>} : vector<1x512xbf16>, vector<512x8xbf16>, vector<1x8xf32> -> vector<1x8xf32>
    %8 = arith.addf %4, %7 : vector<1x8xf32>
    %c0_6 = arith.constant 0 : index
    %c0_7 = arith.constant 0 : index
    %9 = vector.load %arg8[%c0_6, %c0_7] : memref<1x8xf32, #tpu.memory_space<vmem>>, vector<1x8xf32>
    tpu.vector_store %arg8[%c0_6, %c0_7], %8 {strides = array<i32>} : memref<1x8xf32, #tpu.memory_space<vmem>>, vector<1x8xf32>,
    %c1_i32 = arith.constant 1 : i32
    %10 = arith.cmpi eq, %arg1, %c1_i32 : i32
    %11 = arith.extui %10 : i1 to i32
    %c0_i32_8 = arith.constant 0 : i32
    %12 = arith.cmpi ne, %11, %c0_i32_8 : i32
    scf.if %12 {
      %c0_9 = arith.constant 0 : index
      %c0_10 = arith.constant 0 : index
      %13 = vector.load %arg8[%c0_9, %c0_10] : memref<1x8xf32, #tpu.memory_space<vmem>>, vector<1x8xf32>
      %cst_11 = arith.constant 9.765625E-4 : f32
      %14 = vector.broadcast %cst_11 : f32 to vector<1x8xf32>
      %15 = arith.mulf %13, %14 : vector<1x8xf32>
      %16 = arith.truncf %15 : vector<1x8xf32> to vector<1x8xbf16>
      %c0_12 = arith.constant 0 : index
      %c0_13 = arith.constant 0 : index
      %17 = vector.load %arg3[%c0_12, %c0_13] : memref<8x16xbf16, #tpu.memory_space<vmem>>, vector<8x16xbf16>
      %cst_14 = arith.constant dense<0.000000e+00> : vector<1x16xf32>
      %18 = tpu.matmul %16, %17, %cst_14 {dimension_numbers = #tpu.dot_dimension_numbers<[1], [0], [0], [1], [0, 0, 1, 1], [], []>} : vector<1x8xbf16>, vector<8x16xbf16>, vector<1x16xf32> -> vector<1x16xf32>
      %c0_15 = arith.constant 0 : index
      %c0_16 = arith.constant 0 : index
      %19 = vector.load %arg4[%c0_15, %c0_16] : memref<1x16xf32, #tpu.memory_space<vmem>>, vector<1x16xf32>
      %20 = arith.mulf %18, %19 : vector<1x16xf32>
      %c0_17 = arith.constant 0 : index
      %c0_18 = arith.constant 0 : index
      %21 = vector.load %arg5[%c0_17, %c0_18] : memref<1x16xf32, #tpu.memory_space<vmem>>, vector<1x16xf32>
      %22 = arith.addf %20, %21 : vector<1x16xf32>
      %cst_19 = arith.constant 0.000000e+00 : f32
      %23 = vector.broadcast %cst_19 : f32 to vector<1x16xf32>
      %24 = arith.maximumf %22, %23 : vector<1x16xf32>
      %25 = arith.truncf %24 : vector<1x16xf32> to vector<1x16xbf16>
      %c0_20 = arith.constant 0 : index
      %c0_21 = arith.constant 0 : index
      %26 = vector.load %arg6[%c0_20, %c0_21] : memref<16x16xbf16, #tpu.memory_space<vmem>>, vector<16x16xbf16>
      %cst_22 = arith.constant dense<0.000000e+00> : vector<1x16xf32>
      %27 = tpu.matmul %25, %26, %cst_22 {dimension_numbers = #tpu.dot_dimension_numbers<[1], [0], [0], [1], [0, 0, 1, 1], [], []>} : vector<1x16xbf16>, vector<16x16xbf16>, vector<1x16xf32> -> vector<1x16xf32>
      %c0_23 = arith.constant 0 : index
      %c0_24 = arith.constant 0 : index
      %c0_25 = arith.constant 0 : index
      %28 = vector.load %arg7[%c0_23, %c0_24, %c0_25] : memref<1x1x16xf32, #tpu.memory_space<vmem>>, vector<1x1x16xf32>
      %29 = vector.shape_cast %28 : vector<1x1x16xf32> to vector<1x16xf32>
      %30 = vector.shape_cast %27 : vector<1x16xf32> to vector<1x1x16xf32>
      tpu.vector_store %arg7[%c0_23, %c0_24, %c0_25], %30 {strides = array<i32>} : memref<1x1x16xf32, #tpu.memory_space<vmem>>, vector<1x1x16xf32>,
    } else {
    }
    return
  }
  func.func @transform_0(%arg0: i32, %arg1: i32) -> (i32, i32, i32) {
    %c0_i32 = arith.constant 0 : i32
    %c0_i32_0 = arith.constant 0 : i32
    return %arg0, %arg1, %c0_i32 : i32, i32, i32
  }
  func.func @transform_1(%arg0: i32, %arg1: i32) -> (i32, i32) {
    %c0_i32 = arith.constant 0 : i32
    %c0_i32_0 = arith.constant 0 : i32
    %c0_i32_1 = arith.constant 0 : i32
    return %c0_i32, %c0_i32_0 : i32, i32
  }
  func.func @transform_2(%arg0: i32, %arg1: i32) -> (i32, i32) {
    %c0_i32 = arith.constant 0 : i32
    %c0_i32_0 = arith.constant 0 : i32
    %c0_i32_1 = arith.constant 0 : i32
    return %c0_i32, %c0_i32_0 : i32, i32
  }
  func.func @transform_3(%arg0: i32, %arg1: i32) -> (i32, i32) {
    %c0_i32 = arith.constant 0 : i32
    %c0_i32_0 = arith.constant 0 : i32
    %c0_i32_1 = arith.constant 0 : i32
    return %c0_i32, %c0_i32_0 : i32, i32
  }
  func.func @transform_4(%arg0: i32, %arg1: i32) -> (i32, i32) {
    %c0_i32 = arith.constant 0 : i32
    %c0_i32_0 = arith.constant 0 : i32
    %c0_i32_1 = arith.constant 0 : i32
    return %c0_i32, %c0_i32_0 : i32, i32
  }
  func.func @transform_5(%arg0: i32, %arg1: i32) -> (i32, i32, i32) {
    %c0_i32 = arith.constant 0 : i32
    %c0_i32_0 = arith.constant 0 : i32
    %c0_i32_1 = arith.constant 0 : i32
    return %arg0, %c0_i32, %c0_i32_0 : i32, i32, i32
  }
}

</mosaic_0001>

<llo_original>
// kernel: tpu_custom_call.1
$region0: #{tpu_custom_call.1}
  #allocation0 [shape = 'u32[]', space=smem, size = 0x4, offset = 0x4, fixed_abs, tag = 'smem constant byte address 0x4 - core index']
  #allocation1 [shape = 'u32[72,128]{1,0:T(1,128)}', space=vmem, size = 0x9000, scoped, tag = 'internal scratch']
  #allocation2 [shape = 'f32[1,8]{1,0:T(1,128)}', space=vmem, size = 0x200, scoped, tag = 'scratch operand']
  %s0 = inlined_call_operand.vmem [shape: bf16[2,1024,8], index: 0, kind: input, shape index: {}]
  %s1 = inlined_call_operand.vmem [shape: bf16[8,16], index: 1, kind: input, shape index: {}]
  %s2 = inlined_call_operand.vmem [shape: f32[1,16], index: 2, kind: input, shape index: {}]
  %s3 = inlined_call_operand.vmem [shape: f32[1,16], index: 3, kind: input, shape index: {}]
  %s4 = inlined_call_operand.vmem [shape: bf16[16,16], index: 4, kind: input, shape index: {}]
  %s5 = inlined_call_operand.hbm [shape: f32[2,1,16], index: 5, kind: output, shape index: {}]
  %s6 = sld [smem:[#allocation0]]
  $region61: #{tpu_custom_call.1} parent=0
    _
  %s8 = ssub.s32 1, %s6
  %s9 = scalar_select 0, %s8, %s6
  $region1: #{tpu_custom_call.1} parent=0
    #allocation3 [shape = 'u8[1024]{0}', space=vmem, size = 0x400, scoped, tag = 'output window, operand 0']
    #allocation4 [shape = 's32[2]{0}', space=sflag, size = 0x8, scoped, tag = 'scoped memory for tpu_custom_call.1']
    %10 = vsyncpa [#allocation4], 0
    %s11 = scalar_lea.sflag [#allocation4], 1
    %12 = vsyncpa %s11, 0
    loop: start=0, step=1, limit=6
    $region2: #{tpu_custom_call.1} parent=1 // loop_pre_header
      _
    $region3: #{tpu_custom_call.1} parent=1 // loop_header
      %s14 = sphi 0, %s18
      %p15 = scmp.ge.s32.totalorder %s14, 6
      %s21 = sphi 0, %s33
      %s22 = sphi 0, %s29
      %s23 = sphi 0, %s21
      %s24 = sphi 0, %s22
      %s25 = sphi 0, %s23
      %s26 = sphi 0, %s24
      %s38 = sphi 0, %s40
      %s41 = sphi 0, %s38
      %s42 = sphi 0, %s41
      %s58 = sphi 0, %s42
      %s62 = sphi 0, %s62
      %s64 = sphi 0, %s62
      %s65 = sphi 0, %s64
      %s79 = sphi 0, %s65
      %s83 = sphi 0, %s83
      %s85 = sphi 0, %s83
      %s86 = sphi 0, %s85
      %s100 = sphi 0, %s86
      %s104 = sphi 0, %s104
      %s106 = sphi 0, %s104
      %s107 = sphi 0, %s106
      %s121 = sphi 0, %s107
      %s125 = sphi 0, %s125
      %s127 = sphi 0, %s125
      %s128 = sphi 0, %s127
      %s142 = sphi 0, %s128
      %s148 = sphi 0, %s150
      %s151 = sphi 0, %s148
      %s152 = sphi 0, %s151
      %s168 = sphi 0, %s152
    $region4: #{tpu_custom_call.1} parent=1 // loop_header_branch
      %17 = sbr.rel (%p15) target = $region8
    $region5: #{tpu_custom_call.1} parent=1 // loop_body
      %s19 = ssub.s32 %s14, 1
      %s20 = ssub.s32 %s14, 2
      %s27 = sadd.s32 1, %s22
      %p28 = scmp.ge.s32.totalorder %s27, 2
      %s29 = scalar_select %p28, 0, %s27
      %s30 = sadd.s32 1, %s21
      %s31 = scalar_select %p28, %s30, %s21
      %p32 = scmp.ge.s32.totalorder %s31, 2
      %s33 = scalar_select %p32, 0, %s31
      %s34 = ssub.s32 %s21, %s33
      %s35 = ssub.s32 %s22, %s29
      %s36 = sor.u32 %s34, %s35
      %p37 = scmp.eq.s32.totalorder %s36, 0
      %s39 = sadd.s32 %s38, 1
      %s40 = scalar_select %p37, %s38, %s39
      %p43 = pneg %p37
      %p44 = scmp.eq.s32.totalorder %s14, 3
      %p45 = por %p43, %p44
      %p46 = scmp.ne.s32.totalorder %s38, %s41
      %p47 = scmp.eq.s32.totalorder %s14, 0
      %p48 = por %p46, %p47
      %p49 = scmp.ne.s32.totalorder %s38, %s41
      %p50 = scmp.eq.s32.totalorder %s19, 3
      %p51 = por %p49, %p50
      %p52 = scmp.ne.s32.totalorder %s41, %s42
      %p53 = scmp.eq.s32.totalorder %s19, 0
      %p54 = por %p52, %p53
      %p55 = scmp.ne.s32.totalorder %s41, %s42
      %p56 = scmp.eq.s32.totalorder %s20, 3
      %p57 = por %p55, %p56
      %p59 = scmp.ne.s32.totalorder %s42, %s58
      %p60 = scmp.eq.s32.totalorder %s20, 0
      %p61 = por %p59, %p60
      %s63 = sadd.s32 %s62, 1
      %p66 = scmp.eq.s32.totalorder %s14, 3
      %p67 = scmp.ne.s32.totalorder %s62, %s64
      %p68 = scmp.eq.s32.totalorder %s14, 0
      %p69 = por %p67, %p68
      %p70 = scmp.ne.s32.totalorder %s62, %s64
      %p71 = scmp.eq.s32.totalorder %s19, 3
      %p72 = por %p70, %p71
      %p73 = scmp.ne.s32.totalorder %s64, %s65
      %p74 = scmp.eq.s32.totalorder %s19, 0
      %p75 = por %p73, %p74
      %p76 = scmp.ne.s32.totalorder %s64, %s65
      %p77 = scmp.eq.s32.totalorder %s20, 3
      %p78 = por %p76, %p77
      %p80 = scmp.ne.s32.totalorder %s65, %s79
      %p81 = scmp.eq.s32.totalorder %s20, 0
      %p82 = por %p80, %p81
      %s84 = sadd.s32 %s83, 1
      %p87 = scmp.eq.s32.totalorder %s14, 3
      %p88 = scmp.ne.s32.totalorder %s83, %s85
      %p89 = scmp.eq.s32.totalorder %s14, 0
      %p90 = por %p88, %p89
      %p91 = scmp.ne.s32.totalorder %s83, %s85
      %p92 = scmp.eq.s32.totalorder %s19, 3
      %p93 = por %p91, %p92
      %p94 = scmp.ne.s32.totalorder %s85, %s86
      %p95 = scmp.eq.s32.totalorder %s19, 0
      %p96 = por %p94, %p95
      %p97 = scmp.ne.s32.totalorder %s85, %s86
      %p98 = scmp.eq.s32.totalorder %s20, 3
      %p99 = por %p97, %p98
      %p101 = scmp.ne.s32.totalorder %s86, %s100
      %p102 = scmp.eq.s32.totalorder %s20, 0
      %p103 = por %p101, %p102
      %s105 = sadd.s32 %s104, 1
      %p108 = scmp.eq.s32.totalorder %s14, 3
      %p109 = scmp.ne.s32.totalorder %s104, %s106
      %p110 = scmp.eq.s32.totalorder %s14, 0
      %p111 = por %p109, %p110
      %p112 = scmp.ne.s32.totalorder %s104, %s106
      %p113 = scmp.eq.s32.totalorder %s19, 3
      %p114 = por %p112, %p113
      %p115 = scmp.ne.s32.totalorder %s106, %s107
      %p116 = scmp.eq.s32.totalorder %s19, 0
      %p117 = por %p115, %p116
      %p118 = scmp.ne.s32.totalorder %s106, %s107
      %p119 = scmp.eq.s32.totalorder %s20, 3
      %p120 = por %p118, %p119
      %p122 = scmp.ne.s32.totalorder %s107, %s121
      %p123 = scmp.eq.s32.totalorder %s20, 0
      %p124 = por %p122, %p123
      %s126 = sadd.s32 %s125, 1
      %p129 = scmp.eq.s32.totalorder %s14, 3
      %p130 = scmp.ne.s32.totalorder %s125, %s127
      %p131 = scmp.eq.s32.totalorder %s14, 0
      %p132 = por %p130, %p131
      %p133 = scmp.ne.s32.totalorder %s125, %s127
      %p134 = scmp.eq.s32.totalorder %s19, 3
      %p135 = por %p133, %p134
      %p136 = scmp.ne.s32.totalorder %s127, %s128
      %p137 = scmp.eq.s32.totalorder %s19, 0
      %p138 = por %p136, %p137
      %p139 = scmp.ne.s32.totalorder %s127, %s128
      %p140 = scmp.eq.s32.totalorder %s20, 3
      %p141 = por %p139, %p140
      %p143 = scmp.ne.s32.totalorder %s128, %s142
      %p144 = scmp.eq.s32.totalorder %s20, 0
      %p145 = por %p143, %p144
      %s146 = ssub.s32 %s21, %s33
      %p147 = scmp.eq.s32.totalorder %s146, 0
      %s149 = sadd.s32 %s148, 1
      %s150 = scalar_select %p147, %s148, %s149
      %p153 = pneg %p147
      %p154 = scmp.eq.s32.totalorder %s14, 3
      %p155 = por %p153, %p154
      %p156 = scmp.ne.s32.totalorder %s148, %s151
      %p157 = scmp.eq.s32.totalorder %s14, 0
      %p158 = por %p156, %p157
      %p159 = scmp.ne.s32.totalorder %s148, %s151
      %p160 = scmp.eq.s32.totalorder %s19, 3
      %p161 = por %p159, %p160
      %p162 = scmp.ne.s32.totalorder %s151, %s152
      %p163 = scmp.eq.s32.totalorder %s19, 0
      %p164 = por %p162, %p163
      %p165 = scmp.ne.s32.totalorder %s151, %s152
      %p166 = scmp.eq.s32.totalorder %s20, 3
      %p167 = por %p165, %p166
      %p169 = scmp.ne.s32.totalorder %s152, %s168
      %p170 = scmp.eq.s32.totalorder %s20, 0
      %p171 = por %p169, %p170
      %p172 = scmp.le.s32.totalorder 1, %s14
      %p173 = scmp.lt.s32.totalorder %s14, 5
      %p174 = pnand %p172, %p173
      %p175 = pneg %p174
      // Predicated region
      $region9: #{tpu_custom_call.1} parent=5 // pred_check
        _
      $region10: #{tpu_custom_call.1} parent=5 // pred_check_branch
        %177 = sbr.rel (%p174) target = $region12
      $region11: #{tpu_custom_call.1} parent=5 // pred_region
        %s178 = ssub.s32 %s14, 1
        // Predicated region
        $region13: #{tpu_custom_call.1} parent=11 // pred_check
          %p179 = pneg %p75
        $region14: #{tpu_custom_call.1} parent=11 // pred_check_branch
          %181 = sbr.rel (%p179) target = $region16
        $region15: #{tpu_custom_call.1} parent=11 // pred_region
          _
        $region16: #{tpu_custom_call.1} parent=11 // pred_fallthru
          _
        // Predicated region
        $region17: #{tpu_custom_call.1} parent=11 // pred_check
          %p182 = pneg %p96
        $region18: #{tpu_custom_call.1} parent=11 // pred_check_branch
          %184 = sbr.rel (%p182) target = $region20
        $region19: #{tpu_custom_call.1} parent=11 // pred_region
          _
        $region20: #{tpu_custom_call.1} parent=11 // pred_fallthru
          _
        // Predicated region
        $region21: #{tpu_custom_call.1} parent=11 // pred_check
          %p185 = pneg %p117
        $region22: #{tpu_custom_call.1} parent=11 // pred_check_branch
          %187 = sbr.rel (%p185) target = $region24
        $region23: #{tpu_custom_call.1} parent=11 // pred_region
          _
        $region24: #{tpu_custom_call.1} parent=11 // pred_fallthru
          _
        // Predicated region
        $region25: #{tpu_custom_call.1} parent=11 // pred_check
          %p188 = pneg %p138
        $region26: #{tpu_custom_call.1} parent=11 // pred_check_branch
          %190 = sbr.rel (%p188) target = $region28
        $region27: #{tpu_custom_call.1} parent=11 // pred_region
          _
        $region28: #{tpu_custom_call.1} parent=11 // pred_fallthru
          _
      $region12: #{tpu_custom_call.1} parent=5 // pred_fallthru
        _
      %p191 = scmp.lt.s32.totalorder %s14, 4
      // Predicated region
      $region29: #{tpu_custom_call.1} parent=5 // pred_check
        %p192 = pneg %p191
      $region30: #{tpu_custom_call.1} parent=5 // pred_check_branch
        %194 = sbr.rel (%p192) target = $region32
      $region31: #{tpu_custom_call.1} parent=5 // pred_region
        // Predicated region
        $region33: #{tpu_custom_call.1} parent=31 // pred_check
          %p195 = pneg %p48
        $region34: #{tpu_custom_call.1} parent=31 // pred_check_branch
          %197 = sbr.rel (%p195) target = $region36
        $region35: #{tpu_custom_call.1} parent=31 // pred_region
          %s198 = smul.u32 64, %s22
          %p199 = scmp.lt.s32.totalorder %s21, 1
          %s200 = scalar_select %p199, %s21, 1
          %p201 = scmp.lt.s32.totalorder %s198, 127
          %s202 = scalar_select %p201, %s198, 127
          %s203 = smul.addr %s200, 128
          %s204 = sadd.s32 %s202, %s203
          %s205 = smul.addr %s204, 4
          %s206 = scalar_lea.vmem %s0, %s205
          %s207 = smul.u32 64, %s22
        $region36: #{tpu_custom_call.1} parent=31 // pred_fallthru
          _
      $region32: #{tpu_custom_call.1} parent=5 // pred_fallthru
        _
      %p208 = scmp.le.s32.totalorder 1, %s14
      %p209 = scmp.lt.s32.totalorder %s14, 5
      %p210 = pnand %p208, %p209
      %p211 = pneg %p210
      // Predicated region
      $region37: #{tpu_custom_call.1} parent=5 // pred_check
        _
      $region38: #{tpu_custom_call.1} parent=5 // pred_check_branch
        %213 = sbr.rel (%p210) target = $region40
      $region39: #{tpu_custom_call.1} parent=5 // pred_region
        %s214 = ssub.s32 %s14, 1
        %s215 = smul.u32 64, %s24
        %p216 = scmp.lt.s32.totalorder %s23, 1
        %s217 = scalar_select %p216, %s23, 1
        %p218 = scmp.lt.s32.totalorder %s215, 127
        %s219 = scalar_select %p218, %s215, 127
        %s220 = smul.addr %s217, 128
        %s221 = sadd.s32 %s219, %s220
        %s222 = smul.addr %s221, 4
        %s223 = scalar_lea.vmem %s0, %s222
        %p224 = pneg %p54
        %p225 = pneg %p51
        %p226 = pneg %p75
        %p227 = pneg %p72
        %p228 = pneg %p96
        %p229 = pneg %p93
        %p230 = pneg %p117
        %p231 = pneg %p114
        %p232 = pneg %p138
        %p233 = pneg %p135
        %p234 = pneg %p164
        %p235 = pneg %p161
        %s236 = sand.u32 %s151, 1
        %s237 = scalar_lea.sflag [#allocation4], %s236
        %s238 = sand.u32 %s151, 1
        %s239 = scalar_lea.vmem [#allocation3], %s238
        %s240 = smul.u32 64, %s24
        %p241 = scmp.lt.s32.totalorder %s23, 1
        %s242 = scalar_select %p241, %s23, 1
        %p243 = scmp.lt.s32.totalorder %s240, 127
        %s244 = scalar_select %p243, %s240, 127
        %s245 = smul.addr %s242, 128
        %s246 = sadd.s32 %s244, %s245
        %s247 = smul.addr %s246, 4
        %s248 = scalar_lea.vmem %s0, %s247
        %s249 = smul.u32 64, %s24
        %p252 = scmp.eq.s32.totalorder %s24, 0
        // Predicated region
        $region41: #{tpu_custom_call.1} parent=39 // pred_check
          %p253 = pneg %p252
        $region42: #{tpu_custom_call.1} parent=39 // pred_check_branch
          %255 = sbr.rel (%p253) target = $region44
        $region43: #{tpu_custom_call.1} parent=39 // pred_region
          %vm256 = vcmask 57344
          %257 = vst.msk [vmem:[#allocation2] sm:$0x1] %vm256, 0.0
        $region44: #{tpu_custom_call.1} parent=39 // pred_fallthru
          _
        %v258 = vld [vmem:[#allocation2] sm:$0x1]
        %v259 = vld [vmem:[%s248] sm:$0xf]
        %v260 = vld [vmem:[%s248 + $0x4] sm:$0xf]
        %v261 = vld [vmem:[%s248 + $0x8] sm:$0xf]
        %v262 = vld [vmem:[%s248 + $0xc] sm:$0xf]
        %v263 = vld [vmem:[%s248 + $0x10] sm:$0xf]
        %v264 = vld [vmem:[%s248 + $0x14] sm:$0xf]
        %v265 = vld [vmem:[%s248 + $0x18] sm:$0xf]
        %v266 = vld [vmem:[%s248 + $0x1c] sm:$0xf]
        %v267 = vld [vmem:[%s248 + $0x20] sm:$0xf]
        %v268 = vld [vmem:[%s248 + $0x24] sm:$0xf]
        %v269 = vld [vmem:[%s248 + $0x28] sm:$0xf]
        %v270 = vld [vmem:[%s248 + $0x2c] sm:$0xf]
        %v271 = vld [vmem:[%s248 + $0x30] sm:$0xf]
        %v272 = vld [vmem:[%s248 + $0x34] sm:$0xf]
        %v273 = vld [vmem:[%s248 + $0x38] sm:$0xf]
        %v274 = vld [vmem:[%s248 + $0x3c] sm:$0xf]
        %v275 = vld [vmem:[%s248 + $0x40] sm:$0xf]
        %v276 = vld [vmem:[%s248 + $0x44] sm:$0xf]
        %v277 = vld [vmem:[%s248 + $0x48] sm:$0xf]
        %v278 = vld [vmem:[%s248 + $0x4c] sm:$0xf]
        %v279 = vld [vmem:[%s248 + $0x50] sm:$0xf]
        %v280 = vld [vmem:[%s248 + $0x54] sm:$0xf]
        %v281 = vld [vmem:[%s248 + $0x58] sm:$0xf]
        %v282 = vld [vmem:[%s248 + $0x5c] sm:$0xf]
        %v283 = vld [vmem:[%s248 + $0x60] sm:$0xf]
        %v284 = vld [vmem:[%s248 + $0x64] sm:$0xf]
        %v285 = vld [vmem:[%s248 + $0x68] sm:$0xf]
        %v286 = vld [vmem:[%s248 + $0x6c] sm:$0xf]
        %v287 = vld [vmem:[%s248 + $0x70] sm:$0xf]
        %v288 = vld [vmem:[%s248 + $0x74] sm:$0xf]
        %v289 = vld [vmem:[%s248 + $0x78] sm:$0xf]
        %v290 = vld [vmem:[%s248 + $0x7c] sm:$0xf]
        %v291 = vld [vmem:[%s248 + $0x80] sm:$0xf]
        %v292 = vld [vmem:[%s248 + $0x84] sm:$0xf]
        %v293 = vld [vmem:[%s248 + $0x88] sm:$0xf]
        %v294 = vld [vmem:[%s248 + $0x8c] sm:$0xf]
        %v295 = vld [vmem:[%s248 + $0x90] sm:$0xf]
        %v296 = vld [vmem:[%s248 + $0x94] sm:$0xf]
        %v297 = vld [vmem:[%s248 + $0x98] sm:$0xf]
        %v298 = vld [vmem:[%s248 + $0x9c] sm:$0xf]
        %v299 = vld [vmem:[%s248 + $0xa0] sm:$0xf]
        %v300 = vld [vmem:[%s248 + $0xa4] sm:$0xf]
        %v301 = vld [vmem:[%s248 + $0xa8] sm:$0xf]
        %v302 = vld [vmem:[%s248 + $0xac] sm:$0xf]
        %v303 = vld [vmem:[%s248 + $0xb0] sm:$0xf]
        %v304 = vld [vmem:[%s248 + $0xb4] sm:$0xf]
        %v305 = vld [vmem:[%s248 + $0xb8] sm:$0xf]
        %v306 = vld [vmem:[%s248 + $0xbc] sm:$0xf]
        %v307 = vld [vmem:[%s248 + $0xc0] sm:$0xf]
        %v308 = vld [vmem:[%s248 + $0xc4] sm:$0xf]
        %v309 = vld [vmem:[%s248 + $0xc8] sm:$0xf]
        %v310 = vld [vmem:[%s248 + $0xcc] sm:$0xf]
        %v311 = vld [vmem:[%s248 + $0xd0] sm:$0xf]
        %v312 = vld [vmem:[%s248 + $0xd4] sm:$0xf]
        %v313 = vld [vmem:[%s248 + $0xd8] sm:$0xf]
        %v314 = vld [vmem:[%s248 + $0xdc] sm:$0xf]
        %v315 = vld [vmem:[%s248 + $0xe0] sm:$0xf]
        %v316 = vld [vmem:[%s248 + $0xe4] sm:$0xf]
        %v317 = vld [vmem:[%s248 + $0xe8] sm:$0xf]
        %v318 = vld [vmem:[%s248 + $0xec] sm:$0xf]
        %v319 = vld [vmem:[%s248 + $0xf0] sm:$0xf]
        %v320 = vld [vmem:[%s248 + $0xf4] sm:$0xf]
        %v321 = vld [vmem:[%s248 + $0xf8] sm:$0xf]
        %v322 = vld [vmem:[%s248 + $0xfc] sm:$0xf]
        %v387 = vunpack.c.l.b16 %v259
        %v388 = vunpack.c.l.b16 %v260
        %v389 = vunpack.c.l.b16 %v261
        %v390 = vunpack.c.l.b16 %v262
        %v391 = vunpack.c.l.b16 %v263
        %v392 = vunpack.c.l.b16 %v264
        %v393 = vunpack.c.l.b16 %v265
        %v394 = vunpack.c.l.b16 %v266
        %v395 = vunpack.c.l.b16 %v267
        %v396 = vunpack.c.l.b16 %v268
        %v397 = vunpack.c.l.b16 %v269
        %v398 = vunpack.c.l.b16 %v270
        %v399 = vunpack.c.l.b16 %v271
        %v400 = vunpack.c.l.b16 %v272
        %v401 = vunpack.c.l.b16 %v273
        %v402 = vunpack.c.l.b16 %v274
        %v403 = vunpack.c.l.b16 %v275
        %v404 = vunpack.c.l.b16 %v276
        %v405 = vunpack.c.l.b16 %v277
        %v406 = vunpack.c.l.b16 %v278
        %v407 = vunpack.c.l.b16 %v279
        %v408 = vunpack.c.l.b16 %v280
        %v409 = vunpack.c.l.b16 %v281
        %v410 = vunpack.c.l.b16 %v282
        %v411 = vunpack.c.l.b16 %v283
        %v412 = vunpack.c.l.b16 %v284
        %v413 = vunpack.c.l.b16 %v285
        %v414 = vunpack.c.l.b16 %v286
        %v415 = vunpack.c.l.b16 %v287
        %v416 = vunpack.c.l.b16 %v288
        %v417 = vunpack.c.l.b16 %v289
        %v418 = vunpack.c.l.b16 %v290
        %v419 = vunpack.c.l.b16 %v291
        %v420 = vunpack.c.l.b16 %v292
        %v421 = vunpack.c.l.b16 %v293
        %v422 = vunpack.c.l.b16 %v294
        %v423 = vunpack.c.l.b16 %v295
        %v424 = vunpack.c.l.b16 %v296
        %v425 = vunpack.c.l.b16 %v297
        %v426 = vunpack.c.l.b16 %v298
        %v427 = vunpack.c.l.b16 %v299
        %v428 = vunpack.c.l.b16 %v300
        %v429 = vunpack.c.l.b16 %v301
        %v430 = vunpack.c.l.b16 %v302
        %v431 = vunpack.c.l.b16 %v303
        %v432 = vunpack.c.l.b16 %v304
        %v433 = vunpack.c.l.b16 %v305
        %v434 = vunpack.c.l.b16 %v306
        %v435 = vunpack.c.l.b16 %v307
        %v436 = vunpack.c.l.b16 %v308
        %v437 = vunpack.c.l.b16 %v309
        %v438 = vunpack.c.l.b16 %v310
        %v439 = vunpack.c.l.b16 %v311
        %v440 = vunpack.c.l.b16 %v312
        %v441 = vunpack.c.l.b16 %v313
        %v442 = vunpack.c.l.b16 %v314
        %v443 = vunpack.c.l.b16 %v315
        %v444 = vunpack.c.l.b16 %v316
        %v445 = vunpack.c.l.b16 %v317
        %v446 = vunpack.c.l.b16 %v318
        %v447 = vunpack.c.l.b16 %v319
        %v448 = vunpack.c.l.b16 %v320
        %v449 = vunpack.c.l.b16 %v321
        %v450 = vunpack.c.l.b16 %v322
        %v451 = vpack.c.b16 %v388, %v387
        %v452 = vpack.c.b16 %v390, %v389
        %v453 = vpack.c.b16 %v392, %v391
        %v454 = vpack.c.b16 %v394, %v393
        %v455 = vpack.c.b16 %v396, %v395
        %v456 = vpack.c.b16 %v398, %v397
        %v457 = vpack.c.b16 %v400, %v399
        %v458 = vpack.c.b16 %v402, %v401
        %v459 = vpack.c.b16 %v404, %v403
        %v460 = vpack.c.b16 %v406, %v405
        %v461 = vpack.c.b16 %v408, %v407
        %v462 = vpack.c.b16 %v410, %v409
        %v463 = vpack.c.b16 %v412, %v411
        %v464 = vpack.c.b16 %v414, %v413
        %v465 = vpack.c.b16 %v416, %v415
        %v466 = vpack.c.b16 %v418, %v417
        %v467 = vpack.c.b16 %v420, %v419
        %v468 = vpack.c.b16 %v422, %v421
        %v469 = vpack.c.b16 %v424, %v423
        %v470 = vpack.c.b16 %v426, %v425
        %v471 = vpack.c.b16 %v428, %v427
        %v472 = vpack.c.b16 %v430, %v429
        %v473 = vpack.c.b16 %v432, %v431
        %v474 = vpack.c.b16 %v434, %v433
        %v475 = vpack.c.b16 %v436, %v435
        %v476 = vpack.c.b16 %v438, %v437
        %v477 = vpack.c.b16 %v440, %v439
        %v478 = vpack.c.b16 %v442, %v441
        %v479 = vpack.c.b16 %v444, %v443
        %v480 = vpack.c.b16 %v446, %v445
        %v481 = vpack.c.b16 %v448, %v447
        %v482 = vpack.c.b16 %v450, %v449
        %515 = vmatpush.bf16.msra.mxu0 %v458
        %516 = vmatpush.bf16.msra.mxu0 %v457
        %517 = vmatpush.bf16.msra.mxu0 %v456
        %518 = vmatpush.bf16.msra.mxu0 %v455
        %519 = vmatpush.bf16.msra.mxu0 %v454
        %520 = vmatpush.bf16.msra.mxu0 %v453
        %521 = vmatpush.bf16.msra.mxu0 %v452
        %522 = vmatpush.bf16.msra.mxu0 %v451
        %523 = vmatmul.bf16.gmra.mxu0 1065369472
        %v524 = vpop.f32.mrf.mxu0
        %v525 = vadd.f32 0.0, %v524
        %v526 = vpop.f32.mrf.mxu0
        %527 = vdwg.mxu0
        %528 = vmatpush.bf16.msra.mxu0 %v466
        %529 = vmatpush.bf16.msra.mxu0 %v465
        %530 = vmatpush.bf16.msra.mxu0 %v464
        %531 = vmatpush.bf16.msra.mxu0 %v463
        %532 = vmatpush.bf16.msra.mxu0 %v462
        %533 = vmatpush.bf16.msra.mxu0 %v461
        %534 = vmatpush.bf16.msra.mxu0 %v460
        %535 = vmatpush.bf16.msra.mxu0 %v459
        %536 = vmatmul.bf16.gmra.mxu0 1065369472
        %v537 = vpop.f32.mrf.mxu0
        %v538 = vadd.f32 %v525, %v537
        %v539 = vpop.f32.mrf.mxu0
        %540 = vdwg.mxu0
        %541 = vmatpush.bf16.msra.mxu0 %v474
        %542 = vmatpush.bf16.msra.mxu0 %v473
        %543 = vmatpush.bf16.msra.mxu0 %v472
        %544 = vmatpush.bf16.msra.mxu0 %v471
        %545 = vmatpush.bf16.msra.mxu0 %v470
        %546 = vmatpush.bf16.msra.mxu0 %v469
        %547 = vmatpush.bf16.msra.mxu0 %v468
        %548 = vmatpush.bf16.msra.mxu0 %v467
        %549 = vmatmul.bf16.gmra.mxu0 1065369472
        %v550 = vpop.f32.mrf.mxu0
        %v551 = vadd.f32 %v538, %v550
        %v552 = vpop.f32.mrf.mxu0
        %553 = vdwg.mxu0
        %554 = vmatpush.bf16.msra.mxu0 %v482
        %555 = vmatpush.bf16.msra.mxu0 %v481
        %556 = vmatpush.bf16.msra.mxu0 %v480
        %557 = vmatpush.bf16.msra.mxu0 %v479
        %558 = vmatpush.bf16.msra.mxu0 %v478
        %559 = vmatpush.bf16.msra.mxu0 %v477
        %560 = vmatpush.bf16.msra.mxu0 %v476
        %561 = vmatpush.bf16.msra.mxu0 %v475
        %562 = vmatmul.bf16.gmra.mxu0 1065369472
        %v563 = vpop.f32.mrf.mxu0
        %v564 = vadd.f32 %v551, %v563
        %v565 = vpop.f32.mrf.mxu0
        %566 = vdwg.mxu0
        %v567 = vadd.f32 %v258, %v564
        %vm568 = vcmask 57344
        %569 = vst.msk [vmem:[#allocation2] sm:$0x1] %vm568, %v567
        %p570 = scmp.eq.s32.totalorder %s24, 1
        // Predicated region
        $region45: #{tpu_custom_call.1} parent=39 // pred_check
          %p571 = pneg %p570
        $region46: #{tpu_custom_call.1} parent=39 // pred_check_branch
          %573 = sbr.rel (%p571) target = $region48
        $region47: #{tpu_custom_call.1} parent=39 // pred_region
          %v574 = vld [vmem:[#allocation2] sm:$0x1]
          %v575 = vmul.f32 %v574, 0.0009765625
          %v576 = vpack.c.bf16 %v575, %v575
          %v577 = vld [vmem:[%s1] sm:$0xf]
          %vm578 = vcmask 64512
          %v580 = vsel %vm578, %v576, 0
          %vm582 = vcmask 1043456
          %v584 = vsel %vm582, %v577, 0
          %586 = vmatpush.bf16.msra.mxu0 0
          %587 = vmatpush.bf16.msra.mxu0 0
          %588 = vmatpush.bf16.msra.mxu0 0
          %589 = vmatpush.bf16.msra.mxu0 0
          %590 = vmatpush.bf16.msra.mxu0 0
          %591 = vmatpush.bf16.msra.mxu0 0
          %592 = vmatpush.bf16.msra.mxu0 0
          %593 = vmatpush.bf16.msra.mxu0 %v584
          %594 = vmatmul.bf16.gmra.mxu0 %v580
          %v595 = vpop.f32.mrf.mxu0
          %v596 = vadd.f32 0.0, %v595
          %v597 = vpop.f32.mrf.mxu0
          %598 = vdwg.mxu0
          %v599 = vld [vmem:[%s2] sm:$0x1]
          %v600 = vmul.f32 %v596, %v599
          %v601 = vld [vmem:[%s3] sm:$0x1]
          %v602 = vadd.f32 %v600, %v601
          %v603 = vmax.f32 %v602, 0.0
          %v604 = vpack.c.bf16 %v603, %v603
          %v605 = vld [vmem:[%s4] sm:$0xf]
          %v606 = vld [vmem:[%s4 + $0x4] sm:$0xf]
          %v609 = vunpack.c.l.b16 %v605
          %v610 = vunpack.c.l.b16 %v606
          %v611 = vpack.c.b16 %v610, %v609
          %vm613 = vcmask 130048
          %v615 = vsel %vm613, %v604, 0
          %617 = vmatpush.bf16.msra.mxu0 0
          %618 = vmatpush.bf16.msra.mxu0 0
          %619 = vmatpush.bf16.msra.mxu0 0
          %620 = vmatpush.bf16.msra.mxu0 0
          %621 = vmatpush.bf16.msra.mxu0 0
          %622 = vmatpush.bf16.msra.mxu0 0
          %623 = vmatpush.bf16.msra.mxu0 0
          %624 = vmatpush.bf16.msra.mxu0 %v611
          %625 = vmatmul.bf16.gmra.mxu0 %v615
          %v626 = vpop.f32.mrf.mxu0
          %v627 = vadd.f32 0.0, %v626
          %v628 = vpop.f32.mrf.mxu0
          %629 = vdwg.mxu0
          %vm630 = vcmask 122880
          %631 = vst.msk [vmem:[%s239] sm:$0x1] %vm630, %v627
        $region48: #{tpu_custom_call.1} parent=39 // pred_fallthru
          _
        %s632 = sand.u32 %s151, 1
        %s633 = scalar_lea.sflag [#allocation4], %s632
        %s634 = sand.u32 %s151, 1
        %s635 = scalar_lea.vmem [#allocation3], %s634
        // Predicated region
        $region49: #{tpu_custom_call.1} parent=39 // pred_check
          %p636 = pneg %p161
        $region50: #{tpu_custom_call.1} parent=39 // pred_check_branch
          %638 = sbr.rel (%p636) target = $region52
        $region51: #{tpu_custom_call.1} parent=39 // pred_region
          %640 = vsyncadd %s633, 0
          %s641 = scalar_lea.hbm %s5, %s23
          %s643 = sshll.u32 %s635, 4
          %s644 = int_to_ptr.vmem [resolvable:$true] %s643
          %s645 = sshll.u32 %s641, 4
          %s646 = int_to_ptr.hbm [resolvable:$true] %s645
          %648 = dma.vmem_to_hbm [thread:$0]  %s644, 16, %s646, %s633
        $region52: #{tpu_custom_call.1} parent=39 // pred_fallthru
          _
      $region40: #{tpu_custom_call.1} parent=5 // pred_fallthru
        _
      %p649 = scmp.le.s32.totalorder 2, %s14
      // Predicated region
      $region53: #{tpu_custom_call.1} parent=5 // pred_check
        %p650 = pneg %p649
      $region54: #{tpu_custom_call.1} parent=5 // pred_check_branch
        %652 = sbr.rel (%p650) target = $region56
      $region55: #{tpu_custom_call.1} parent=5 // pred_region
        %s653 = ssub.s32 %s14, 2
        // Predicated region
        $region57: #{tpu_custom_call.1} parent=55 // pred_check
          %p654 = pneg %p167
        $region58: #{tpu_custom_call.1} parent=55 // pred_check_branch
          %656 = sbr.rel (%p654) target = $region60
        $region59: #{tpu_custom_call.1} parent=55 // pred_region
          %s657 = sand.u32 %s152, 1
          %s658 = scalar_lea.sflag [#allocation4], %s657
          %s659 = sand.u32 %s152, 1
          %s660 = scalar_lea.vmem [#allocation3], %s659
          %662 = dma.done %s658, 16
        $region60: #{tpu_custom_call.1} parent=55 // pred_fallthru
          _
      $region56: #{tpu_custom_call.1} parent=5 // pred_fallthru
        _
    $region6: #{tpu_custom_call.1} parent=1 // loop_footer
      %s18 = sadd.s32 1, %s14
    $region7: #{tpu_custom_call.1} parent=1 // loop_footer_branch
      %13 = sbr.rel target = $region3
    $region8: #{tpu_custom_call.1} parent=1 // loop_exit
      _
    %663 = vsyncpa [#allocation4], 1
    %s664 = scalar_lea.sflag [#allocation4], 1
    %665 = vsyncpa %s664, 1

</llo_original>
